<compile_context>
chip_gen: v7x
topology: tpu7x:2x2x1
jax: 0.10.0
libtpu: 0.0.40
codegen_flags: <defaults>
</compile_context>

<pallas_src>
import functools

import jax
import jax.numpy as jnp
from jax import lax
from jax.experimental import pallas as pl
from jax.experimental.pallas import tpu as pltpu


def _focal_loss_kernel(x_ref, t_ref, out_ref, *, gamma_kind, gamma_i, gamma_f,
                       hard_labels, rows, block_rows, need_mask):
    i = pl.program_id(1)

    # Output block index is constant along the inner ("arbitrary") grid axis,
    # so this (8, 128) block stays resident in VMEM and acts as the accumulator.
    @pl.when(i == 0)
    def _():
        out_ref[...] = jnp.zeros_like(out_ref)

    p = x_ref[...].astype(jnp.float32)
    t = t_ref[...].astype(jnp.float32)

    if hard_labels:
        # Hard {0,1} targets: one transcendental per element.
        q = jnp.where(t >= 0.5, p, 1.0 - p)              # prob. of the true class
        ce = -jnp.maximum(jnp.log(q), -100.0)            # torch BCE clamps at -100
        pt = q                                           # == exp(-ce) up to the clamp
    else:
        # General (soft-label-safe) path: 3 transcendentals per element.
        log_p = jnp.maximum(jnp.log(p), -100.0)
        log_1mp = jnp.maximum(jnp.log(1.0 - p), -100.0)
        ce = -(t * log_p + (1.0 - t) * log_1mp)
        pt = jnp.exp(-ce)

    one_minus_pt = 1.0 - pt
    if gamma_kind == "int":                              # VALU multiplies only
        w = lax.integer_pow(one_minus_pt, gamma_i)
    elif gamma_kind == "half":                           # 1 EUP op (sqrt)
        w = jnp.sqrt(lax.integer_pow(one_minus_pt, gamma_i))
    else:                                                # pow -> exp(g*log x)
        w = one_minus_pt ** gamma_f
    focal = w * ce

    if need_mask:
        # Zero rows past the logical end of the data: the tail of the last
        # partial block and fully-phantom blocks (clamped index_map).
        row0 = (pl.program_id(0) * pl.num_programs(1) + i) * block_rows
        r = lax.broadcasted_iota(jnp.int32, focal.shape, 0)
        focal = jnp.where(row0 + r < rows, focal, 0.0)

    # Fold (block_rows, 128) down to one (8, 128) vreg-shaped partial sum with
    # pure element-wise adds (no cross-lane / sublane XLU work).
    br, cols = focal.shape
    out_ref[...] += focal.reshape(br // 8, 8, cols).sum(axis=0)


def _round_up(a, m):
    return -(-a // m) * m


def _sublane_multiple(dtype):
    # (8,128) tiling for 4-byte dtypes, (16,128) for 2-byte, (32,128) for 1-byte.
    return max(8, 32 // jnp.dtype(dtype).itemsize)


def focal_loss(inputs, targets, gamma=2, alpha=None, *, hard_labels=False,
               block_rows=2048, num_splits=2):
    """Mean-reduced focal loss over arbitrarily shaped probability tensors."""
    inputs = jnp.asarray(inputs)
    targets = jnp.asarray(targets)
    assert inputs.shape == targets.shape
    numel = int(inputs.size)
    cols = 128

    x = inputs.reshape(-1)
    t = targets.reshape(-1)

    sub = max(_sublane_multiple(x.dtype), _sublane_multiple(t.dtype))

    # Pad only when numel is not a multiple of 128 (or the array is tiny).
    # Padding with (p=1, t=1) contributes exactly zero focal loss, so only the
    # true numel enters the mean.  Aligned inputs take a copy-free path
    # (reshape of a flat contiguous array is metadata only).
    rows = max(-(-numel // cols), sub)
    padded = rows * cols
    if padded != numel:
        x = jnp.pad(x, (0, padded - numel), constant_values=1.0)
        t = jnp.pad(t, (0, padded - numel), constant_values=1.0)
    x = x.reshape(rows, cols)
    t = t.reshape(rows, cols)

    # Block geometry: multiple of the sublane requirement, never larger than
    # the array; default 2048 rows = 1 MiB / f32 input tile (4 MiB total with
    # double buffering), comfortably under every chip's scoped-VMEM default.
    br = min(_round_up(int(block_rows), sub), (rows // sub) * sub)
    br = max(br, sub)

    total_blocks = -(-rows // br)
    num_splits = max(1, int(num_splits))
    steps = -(-total_blocks // num_splits)
    need_mask = (num_splits * steps * br) != rows
    last_block = total_blocks - 1

    # gamma handling: integer -> integer_pow (VALU); half-integer ->
    # sqrt(integer_pow) (1 EUP op); otherwise float-pow fallback.
    g = float(gamma)
    if g == round(g):
        gamma_kind, gamma_i = "int", int(round(g))
    elif 2.0 * g == round(2.0 * g):
        gamma_kind, gamma_i = "half", int(round(2.0 * g))
    else:
        gamma_kind, gamma_i = "float", 0

    kernel = functools.partial(
        _focal_loss_kernel,
        gamma_kind=gamma_kind, gamma_i=gamma_i, gamma_f=g,
        hard_labels=bool(hard_labels), rows=rows, block_rows=br,
        need_mask=need_mask)

    if need_mask:
        # Clamp so phantom steps of the rectangular grid re-read the last valid
        # block; their contribution is masked to zero inside the kernel.
        def in_map(c, i):
            return (jnp.minimum(c * steps + i, last_block), 0)
    else:
        def in_map(c, i):
            return (c * steps + i, 0)

    in_bytes = rows * cols * (jnp.dtype(x.dtype).itemsize
                              + jnp.dtype(t.dtype).itemsize)
    cost = pl.CostEstimate(
        flops=12 * numel,
        transcendentals=(1 if hard_labels else 3) * numel,
        bytes_accessed=in_bytes + num_splits * 8 * cols * 4,
    )

    partials = pl.pallas_call(
        kernel,
        out_shape=jax.ShapeDtypeStruct((num_splits * 8, cols), jnp.float32),
        grid_spec=pltpu.PrefetchScalarGridSpec(
            num_scalar_prefetch=0,
            grid=(num_splits, steps),
            in_specs=[
                pl.BlockSpec((br, cols), in_map),
                pl.BlockSpec((br, cols), in_map),
            ],
            out_specs=pl.BlockSpec((8, cols), lambda c, i: (c, 0)),
        ),
        # TODO(synk): on v7x, pltpu.CORE_PARALLEL on axis 0 (num_splits == #TCs)
        # would guarantee the two slices land on separate TensorCores.
        compiler_params=pltpu.CompilerParams(
            dimension_semantics=("parallel", "arbitrary"),
        ),
        cost_estimate=cost,
    )(x, t)

    scale = 1.0 / float(numel)
    if alpha is not None:
        scale = scale * float(alpha)
    return jnp.sum(partials) * scale


def focal_loss_ref(inputs, targets, gamma=2, alpha=None):
    log_p = jnp.maximum(jnp.log(inputs), -100.0)
    log_1mp = jnp.maximum(jnp.log(1.0 - inputs), -100.0)
    ce = -(targets * log_p + (1.0 - targets) * log_1mp)
    pt = jnp.exp(-ce)
    fl = (1.0 - pt) ** gamma * ce
    if alpha is not None:
        fl = alpha * fl
    return jnp.mean(fl)


if __name__ == "__main__":
    key = jax.random.PRNGKey(0)
    k1, k2, k3, k4, k5, k6 = jax.random.split(key, 6)

    # Case 1: aligned batch, hard {0,1} labels (1-transcendental fast path),
    # small block_rows so both grid slices do several accumulation steps.
    inputs1 = jax.nn.sigmoid(jax.random.normal(k1, (512, 128), dtype=jnp.float32))
    targets1 = jax.random.bernoulli(k2, 0.5, (512, 128)).astype(jnp.float32)
    out1 = jax.block_until_ready(
        focal_loss(inputs1, targets1, gamma=2, hard_labels=True, block_rows=64))
    ref1 = focal_loss_ref(inputs1, targets1, gamma=2)
    assert jnp.allclose(out1, ref1, rtol=2e-5, atol=1e-6), (out1, ref1)

    # Same data through the general soft-label path with default tiling.
    out1b = jax.block_until_ready(focal_loss(inputs1, targets1, gamma=2))
    assert jnp.allclose(out1b, ref1, rtol=2e-5, atol=1e-6), (out1b, ref1)

    # Case 2: ragged shape (minimal tail pad + in-kernel mask) + alpha, soft targets.
    inputs2 = jax.nn.sigmoid(jax.random.normal(k3, (6, 50), dtype=jnp.float32))
    targets2 = jax.random.uniform(k4, (6, 50), dtype=jnp.float32)
    out2 = jax.block_until_ready(focal_loss(inputs2, targets2, gamma=2, alpha=0.25))
    ref2 = focal_loss_ref(inputs2, targets2, gamma=2, alpha=0.25)
    assert jnp.allclose(out2, ref2, rtol=2e-5, atol=1e-6), (out2, ref2)

    # Case 3: bf16 inputs streamed at 2 B/elem, half-integer gamma (sqrt path).
    inputs3 = jax.nn.sigmoid(
        jax.random.normal(k5, (16, 256), dtype=jnp.float32)).astype(jnp.bfloat16)
    targets3 = jax.random.uniform(k6, (16, 256), dtype=jnp.float32).astype(jnp.bfloat16)
    out3 = jax.block_until_ready(focal_loss(inputs3, targets3, gamma=1.5))
    ref3 = focal_loss_ref(inputs3.astype(jnp.float32), targets3.astype(jnp.float32),
                          gamma=1.5)
    assert jnp.allclose(out3, ref3, rtol=5e-5, atol=1e-6), (out3, ref3)

    print("KERNEL_OK")
</pallas_src>

<mosaic_0001>
module attributes {stable_mosaic.version = 11 : i64} {
  func.func @_focal_loss_kernel(%arg0: i32, %arg1: i32, %arg2: memref<64x128xf32, #tpu.memory_space<vmem>>, %arg3: memref<64x128xf32, #tpu.memory_space<vmem>>, %arg4: memref<8x128xf32, #tpu.memory_space<vmem>>) attributes {dimension_semantics = [#tpu.dimension_semantics<parallel>, #tpu.dimension_semantics<arbitrary>], iteration_bounds = array<i64: 2, 4>, scalar_prefetch = 0 : i64, scratch_operands = 0 : i64, tpu.core_type = #tpu.core_type<tc>, window_params = [{transform_indices = @transform_0, window_bounds = array<i64: 64, 128>}, {transform_indices = @transform_1, window_bounds = array<i64: 64, 128>}, {transform_indices = @transform_2, window_bounds = array<i64: 8, 128>}]} {
    %c0_i32 = arith.constant 0 : i32
    %0 = arith.cmpi eq, %arg1, %c0_i32 : i32
    %1 = arith.extui %0 : i1 to i32
    %c0_i32_0 = arith.constant 0 : i32
    %2 = arith.cmpi ne, %1, %c0_i32_0 : i32
    scf.if %2 {
      %cst_13 = arith.constant 0.000000e+00 : f32
      %24 = vector.broadcast %cst_13 : f32 to vector<8x128xf32>
      %c0_14 = arith.constant 0 : index
      %c0_15 = arith.constant 0 : index
      %25 = vector.load %arg4[%c0_14, %c0_15] : memref<8x128xf32, #tpu.memory_space<vmem>>, vector<8x128xf32>
      tpu.vector_store %arg4[%c0_14, %c0_15], %24 {strides = array<i32>} : memref<8x128xf32, #tpu.memory_space<vmem>>, vector<8x128xf32>,
    } else {
    }
    %c0 = arith.constant 0 : index
    %c0_1 = arith.constant 0 : index
    %3 = vector.load %arg2[%c0, %c0_1] : memref<64x128xf32, #tpu.memory_space<vmem>>, vector<64x128xf32>
    %c0_2 = arith.constant 0 : index
    %c0_3 = arith.constant 0 : index
    %4 = vector.load %arg3[%c0_2, %c0_3] : memref<64x128xf32, #tpu.memory_space<vmem>>, vector<64x128xf32>
    %cst = arith.constant 5.000000e-01 : f32
    %5 = vector.broadcast %cst : f32 to vector<64x128xf32>
    %6 = arith.cmpf oge, %4, %5 : vector<64x128xf32>
    %cst_4 = arith.constant 1.000000e+00 : f32
    %7 = vector.broadcast %cst_4 : f32 to vector<64x128xf32>
    %8 = arith.subf %7, %3 : vector<64x128xf32>
    %9 = arith.select %6, %3, %8 : vector<64x128xi1>, vector<64x128xf32>
    %10 = math.log %9 : vector<64x128xf32>
    %cst_5 = arith.constant -1.000000e+02 : f32
    %11 = vector.broadcast %cst_5 : f32 to vector<64x128xf32>
    %12 = arith.maximumf %10, %11 : vector<64x128xf32>
    %cst_6 = arith.constant 0.000000e+00 : f32
    %13 = vector.broadcast %cst_6 : f32 to vector<64x128xf32>
    %14 = arith.subf %13, %12 : vector<64x128xf32>
    %cst_7 = arith.constant 1.000000e+00 : f32
    %15 = vector.broadcast %cst_7 : f32 to vector<64x128xf32>
    %16 = arith.subf %15, %9 : vector<64x128xf32>
    %17 = arith.mulf %16, %16 : vector<64x128xf32>
    %18 = arith.mulf %17, %14 : vector<64x128xf32>
    %c0_8 = arith.constant 0 : index
    %c0_9 = arith.constant 0 : index
    %19 = vector.load %arg4[%c0_8, %c0_9] : memref<8x128xf32, #tpu.memory_space<vmem>>, vector<8x128xf32>
    %20 = vector.shape_cast %18 : vector<64x128xf32> to vector<8x8x128xf32>
    %cst_10 = arith.constant dense<0.000000e+00> : vector<8x128xf32>
    %21 = vector.multi_reduction <add>, %20, %cst_10 [0] : vector<8x8x128xf32> to vector<8x128xf32>
    %22 = arith.addf %19, %21 : vector<8x128xf32>
    %c0_11 = arith.constant 0 : index
    %c0_12 = arith.constant 0 : index
    %23 = vector.load %arg4[%c0_11, %c0_12] : memref<8x128xf32, #tpu.memory_space<vmem>>, vector<8x128xf32>
    tpu.vector_store %arg4[%c0_11, %c0_12], %22 {strides = array<i32>} : memref<8x128xf32, #tpu.memory_space<vmem>>, vector<8x128xf32>,
    return
  }
  func.func @transform_0(%arg0: i32, %arg1: i32) -> (i32, i32) {
    %c4_i32 = arith.constant 4 : i32
    %0 = arith.muli %arg0, %c4_i32 : i32
    %1 = arith.addi %0, %arg1 : i32
    %c0_i32 = arith.constant 0 : i32
    %c0_i32_0 = arith.constant 0 : i32
    return %1, %c0_i32 : i32, i32
  }
  func.func @transform_1(%arg0: i32, %arg1: i32) -> (i32, i32) {
    %c4_i32 = arith.constant 4 : i32
    %0 = arith.muli %arg0, %c4_i32 : i32
    %1 = arith.addi %0, %arg1 : i32
    %c0_i32 = arith.constant 0 : i32
    %c0_i32_0 = arith.constant 0 : i32
    return %1, %c0_i32 : i32, i32
  }
  func.func @transform_2(%arg0: i32, %arg1: i32) -> (i32, i32) {
    %c0_i32 = arith.constant 0 : i32
    %c0_i32_0 = arith.constant 0 : i32
    return %arg0, %c0_i32 : i32, i32
  }
}

</mosaic_0001>

<llo_original>
// kernel: tpu_custom_call.1
$region0: #{tpu_custom_call.1}
  #allocation0 [shape = 'u32[]', space=smem, size = 0x4, offset = 0x4, fixed_abs, tag = 'smem constant byte address 0x4 - core index']
  #allocation1 [shape = 'u32[144,128]{1,0:T(1,128)}', space=vmem, size = 0x12000, scoped, tag = 'internal scratch']
  %s0 = inlined_call_operand.hbm [shape: f32[512,128], index: 0, kind: input, shape index: {}]
  %s1 = inlined_call_operand.hbm [shape: f32[512,128], index: 1, kind: input, shape index: {}]
  %s2 = inlined_call_operand.hbm [shape: f32[16,128], index: 2, kind: output, shape index: {}]
  %s3 = sld [smem:[#allocation0]]
  $region53: #{tpu_custom_call.1} parent=0
    _
  %s5 = ssub.s32 1, %s3
  %s6 = scalar_select 0, %s5, %s3
  $region1: #{tpu_custom_call.1} parent=0
    #allocation2 [shape = 'u8[65536]{0}', space=vmem, size = 0x10000, scoped, tag = 'input window, operand 0']
    #allocation3 [shape = 's32[2]{0}', space=sflag, size = 0x8, scoped, tag = 'scoped memory for tpu_custom_call.1']
    #allocation4 [shape = 's32[2]{0}', space=sflag, size = 0x8, scoped, tag = 'scoped memory for tpu_custom_call.1']
    #allocation5 [shape = 'u8[65536]{0}', space=vmem, size = 0x10000, scoped, tag = 'input window, operand 1']
    #allocation6 [shape = 's32[2]{0}', space=sflag, size = 0x8, scoped, tag = 'scoped memory for tpu_custom_call.1']
    #allocation7 [shape = 'u8[8192]{0}', space=vmem, size = 0x2000, scoped, tag = 'output window, operand 0']
    %7 = vsyncpa [#allocation3], 0
    %s8 = scalar_lea.sflag [#allocation3], 1
    %9 = vsyncpa %s8, 0
    %10 = vsyncpa [#allocation6], 0
    %s11 = scalar_lea.sflag [#allocation6], 1
    %12 = vsyncpa %s11, 0
    %13 = vsyncpa [#allocation4], 0
    %s14 = scalar_lea.sflag [#allocation4], 1
    %15 = vsyncpa %s14, 0
    loop: start=0, step=1, limit=10
    $region2: #{tpu_custom_call.1} parent=1 // loop_pre_header
      _
    $region3: #{tpu_custom_call.1} parent=1 // loop_header
      %s17 = sphi 0, %s21
      %p18 = scmp.ge.s32.totalorder %s17, 10
      %s24 = sphi 0, %s36
      %s25 = sphi 0, %s32
      %s26 = sphi 0, %s24
      %s27 = sphi 0, %s25
      %s28 = sphi 0, %s26
      %s29 = sphi 0, %s27
      %s43 = sphi 0, %s45
      %s46 = sphi 0, %s43
      %s47 = sphi 0, %s46
      %s63 = sphi 0, %s47
      %s73 = sphi 0, %s75
      %s76 = sphi 0, %s73
      %s77 = sphi 0, %s76
      %s93 = sphi 0, %s77
      %s99 = sphi 0, %s101
      %s102 = sphi 0, %s99
      %s103 = sphi 0, %s102
      %s119 = sphi 0, %s103
    $region4: #{tpu_custom_call.1} parent=1 // loop_header_branch
      %20 = sbr.rel (%p18) target = $region8
    $region5: #{tpu_custom_call.1} parent=1 // loop_body
      %s22 = ssub.s32 %s17, 1
      %s23 = ssub.s32 %s17, 2
      %s30 = sadd.s32 1, %s25
      %p31 = scmp.ge.s32.totalorder %s30, 4
      %s32 = scalar_select %p31, 0, %s30
      %s33 = sadd.s32 1, %s24
      %s34 = scalar_select %p31, %s33, %s24
      %p35 = scmp.ge.s32.totalorder %s34, 2
      %s36 = scalar_select %p35, 0, %s34
      %s37 = smul.u32 %s24, 4
      %s38 = sadd.s32 %s37, %s25
      %s39 = smul.u32 %s36, 4
      %s40 = sadd.s32 %s39, %s32
      %s41 = ssub.s32 %s38, %s40
      %p42 = scmp.eq.s32.totalorder %s41, 0
      %s44 = sadd.s32 %s43, 1
      %s45 = scalar_select %p42, %s43, %s44
      %p48 = pneg %p42
      %p49 = scmp.eq.s32.totalorder %s17, 7
      %p50 = por %p48, %p49
      %p51 = scmp.ne.s32.totalorder %s43, %s46
      %p52 = scmp.eq.s32.totalorder %s17, 0
      %p53 = por %p51, %p52
      %p54 = scmp.ne.s32.totalorder %s43, %s46
      %p55 = scmp.eq.s32.totalorder %s22, 7
      %p56 = por %p54, %p55
      %p57 = scmp.ne.s32.totalorder %s46, %s47
      %p58 = scmp.eq.s32.totalorder %s22, 0
      %p59 = por %p57, %p58
      %p60 = scmp.ne.s32.totalorder %s46, %s47
      %p61 = scmp.eq.s32.totalorder %s23, 7
      %p62 = por %p60, %p61
      %p64 = scmp.ne.s32.totalorder %s47, %s63
      %p65 = scmp.eq.s32.totalorder %s23, 0
      %p66 = por %p64, %p65
      %s67 = smul.u32 %s24, 4
      %s68 = sadd.s32 %s67, %s25
      %s69 = smul.u32 %s36, 4
      %s70 = sadd.s32 %s69, %s32
      %s71 = ssub.s32 %s68, %s70
      %p72 = scmp.eq.s32.totalorder %s71, 0
      %s74 = sadd.s32 %s73, 1
      %s75 = scalar_select %p72, %s73, %s74
      %p78 = pneg %p72
      %p79 = scmp.eq.s32.totalorder %s17, 7
      %p80 = por %p78, %p79
      %p81 = scmp.ne.s32.totalorder %s73, %s76
      %p82 = scmp.eq.s32.totalorder %s17, 0
      %p83 = por %p81, %p82
      %p84 = scmp.ne.s32.totalorder %s73, %s76
      %p85 = scmp.eq.s32.totalorder %s22, 7
      %p86 = por %p84, %p85
      %p87 = scmp.ne.s32.totalorder %s76, %s77
      %p88 = scmp.eq.s32.totalorder %s22, 0
      %p89 = por %p87, %p88
      %p90 = scmp.ne.s32.totalorder %s76, %s77
      %p91 = scmp.eq.s32.totalorder %s23, 7
      %p92 = por %p90, %p91
      %p94 = scmp.ne.s32.totalorder %s77, %s93
      %p95 = scmp.eq.s32.totalorder %s23, 0
      %p96 = por %p94, %p95
      %s97 = ssub.s32 %s24, %s36
      %p98 = scmp.eq.s32.totalorder %s97, 0
      %s100 = sadd.s32 %s99, 1
      %s101 = scalar_select %p98, %s99, %s100
      %p104 = pneg %p98
      %p105 = scmp.eq.s32.totalorder %s17, 7
      %p106 = por %p104, %p105
      %p107 = scmp.ne.s32.totalorder %s99, %s102
      %p108 = scmp.eq.s32.totalorder %s17, 0
      %p109 = por %p107, %p108
      %p110 = scmp.ne.s32.totalorder %s99, %s102
      %p111 = scmp.eq.s32.totalorder %s22, 7
      %p112 = por %p110, %p111
      %p113 = scmp.ne.s32.totalorder %s102, %s103
      %p114 = scmp.eq.s32.totalorder %s22, 0
      %p115 = por %p113, %p114
      %p116 = scmp.ne.s32.totalorder %s102, %s103
      %p117 = scmp.eq.s32.totalorder %s23, 7
      %p118 = por %p116, %p117
      %p120 = scmp.ne.s32.totalorder %s103, %s119
      %p121 = scmp.eq.s32.totalorder %s23, 0
      %p122 = por %p120, %p121
      %p123 = scmp.le.s32.totalorder 1, %s17
      %p124 = scmp.lt.s32.totalorder %s17, 9
      %p125 = pnand %p123, %p124
      %p126 = pneg %p125
      // Predicated region
      $region9: #{tpu_custom_call.1} parent=5 // pred_check
        _
      $region10: #{tpu_custom_call.1} parent=5 // pred_check_branch
        %128 = sbr.rel (%p125) target = $region12
      $region11: #{tpu_custom_call.1} parent=5 // pred_region
        %s129 = ssub.s32 %s17, 1
      $region12: #{tpu_custom_call.1} parent=5 // pred_fallthru
        _
      %p130 = scmp.lt.s32.totalorder %s17, 8
      // Predicated region
      $region13: #{tpu_custom_call.1} parent=5 // pred_check
        %p131 = pneg %p130
      $region14: #{tpu_custom_call.1} parent=5 // pred_check_branch
        %133 = sbr.rel (%p131) target = $region16
      $region15: #{tpu_custom_call.1} parent=5 // pred_region
        // Predicated region
        $region17: #{tpu_custom_call.1} parent=15 // pred_check
          %p134 = pneg %p53
        $region18: #{tpu_custom_call.1} parent=15 // pred_check_branch
          %136 = sbr.rel (%p134) target = $region20
        $region19: #{tpu_custom_call.1} parent=15 // pred_region
          %s137 = sand.u32 %s43, 1
          %s138 = scalar_lea.sflag [#allocation3], %s137
          %s139 = sand.u32 %s43, 1
          %s140 = smul.addr %s139, 64
          %s141 = scalar_lea.vmem [#allocation2], %s140
          %s142 = smul.u32 %s24, 4
          %s143 = sadd.s32 %s142, %s25
          %s144 = smul.u32 8, %s143
          %s146 = ssub.s32 1024, 1024
          %147 = vsyncadd %s138, %s146
          %s148 = smul.addr %s144, 128
          %s149 = scalar_lea.hbm %s0, %s148
          %s150 = sshll.u32 %s141, 4
          %s151 = int_to_ptr.vmem [resolvable:$true] %s150
          %156 = dma.hbm_to_vmem [thread:$0]  %s149, 1024, %s151, %s138, 128, 128, 8
        $region20: #{tpu_custom_call.1} parent=15 // pred_fallthru
          _
        // Predicated region
        $region21: #{tpu_custom_call.1} parent=15 // pred_check
          %p157 = pneg %p83
        $region22: #{tpu_custom_call.1} parent=15 // pred_check_branch
          %159 = sbr.rel (%p157) target = $region24
        $region23: #{tpu_custom_call.1} parent=15 // pred_region
          %s160 = sand.u32 %s73, 1
          %s161 = scalar_lea.sflag [#allocation6], %s160
          %s162 = sand.u32 %s73, 1
          %s163 = smul.addr %s162, 64
          %s164 = scalar_lea.vmem [#allocation5], %s163
          %s165 = smul.u32 %s24, 4
          %s166 = sadd.s32 %s165, %s25
          %s167 = smul.u32 8, %s166
          %s169 = ssub.s32 1024, 1024
          %170 = vsyncadd %s161, %s169
          %s171 = smul.addr %s167, 128
          %s172 = scalar_lea.hbm %s1, %s171
          %s173 = sshll.u32 %s164, 4
          %s174 = int_to_ptr.vmem [resolvable:$true] %s173
          %179 = dma.hbm_to_vmem [thread:$0]  %s172, 1024, %s174, %s161, 128, 128, 8
        $region24: #{tpu_custom_call.1} parent=15 // pred_fallthru
          _
      $region16: #{tpu_custom_call.1} parent=5 // pred_fallthru
        _
      %p180 = scmp.le.s32.totalorder 1, %s17
      %p181 = scmp.lt.s32.totalorder %s17, 9
      %p182 = pnand %p180, %p181
      %p183 = pneg %p182
      // Predicated region
      $region25: #{tpu_custom_call.1} parent=5 // pred_check
        _
      $region26: #{tpu_custom_call.1} parent=5 // pred_check_branch
        %185 = sbr.rel (%p182) target = $region28
      $region27: #{tpu_custom_call.1} parent=5 // pred_region
        %s186 = ssub.s32 %s17, 1
        %s187 = sand.u32 %s46, 1
        %s188 = scalar_lea.sflag [#allocation3], %s187
        %s189 = sand.u32 %s46, 1
        %s190 = smul.addr %s189, 64
        %s191 = scalar_lea.vmem [#allocation2], %s190
        // Predicated region
        $region29: #{tpu_custom_call.1} parent=27 // pred_check
          %p192 = pneg %p59
        $region30: #{tpu_custom_call.1} parent=27 // pred_check_branch
          %194 = sbr.rel (%p192) target = $region32
        $region31: #{tpu_custom_call.1} parent=27 // pred_region
          %195 = dma.done %s188, 1024
        $region32: #{tpu_custom_call.1} parent=27 // pred_fallthru
          _
        %s196 = sand.u32 %s76, 1
        %s197 = scalar_lea.sflag [#allocation6], %s196
        %s198 = sand.u32 %s76, 1
        %s199 = smul.addr %s198, 64
        %s200 = scalar_lea.vmem [#allocation5], %s199
        // Predicated region
        $region33: #{tpu_custom_call.1} parent=27 // pred_check
          %p201 = pneg %p89
        $region34: #{tpu_custom_call.1} parent=27 // pred_check_branch
          %203 = sbr.rel (%p201) target = $region36
        $region35: #{tpu_custom_call.1} parent=27 // pred_region
          %204 = dma.done %s197, 1024
        $region36: #{tpu_custom_call.1} parent=27 // pred_fallthru
          _
        %s205 = sand.u32 %s46, 1
        %s206 = scalar_lea.sflag [#allocation3], %s205
        %s207 = sand.u32 %s46, 1
        %s208 = smul.addr %s207, 64
        %s209 = scalar_lea.vmem [#allocation2], %s208
        %p210 = pneg %p59
        %p211 = pneg %p56
        %s212 = sand.u32 %s76, 1
        %s213 = scalar_lea.sflag [#allocation6], %s212
        %s214 = sand.u32 %s76, 1
        %s215 = smul.addr %s214, 64
        %s216 = scalar_lea.vmem [#allocation5], %s215
        %p217 = pneg %p89
        %p218 = pneg %p86
        %p219 = pneg %p115
        %p220 = pneg %p112
        %s221 = sand.u32 %s102, 1
        %s222 = scalar_lea.sflag [#allocation4], %s221
        %s223 = sand.u32 %s102, 1
        %s224 = smul.addr %s223, 8
        %s225 = scalar_lea.vmem [#allocation7], %s224
        %s226 = smul.u32 %s26, 4
        %s227 = sadd.s32 %s226, %s27
        %s228 = smul.u32 8, %s227
        %s229 = smul.u32 %s26, 4
        %s230 = sadd.s32 %s229, %s27
        %s231 = smul.u32 8, %s230
        %p232 = scmp.eq.s32.totalorder %s27, 0
        // Predicated region
        $region37: #{tpu_custom_call.1} parent=27 // pred_check
          %p233 = pneg %p232
        $region38: #{tpu_custom_call.1} parent=27 // pred_check_branch
          %235 = sbr.rel (%p233) target = $region40
        $region39: #{tpu_custom_call.1} parent=27 // pred_region
          %236 = vst [vmem:[%s225] sm:$0xff] 0.0
        $region40: #{tpu_custom_call.1} parent=27 // pred_fallthru
          _
        %v237 = vld [vmem:[%s191] sm:$0xff]
        %v238 = vld [vmem:[%s191 + $0x8] sm:$0xff]
        %v239 = vld [vmem:[%s191 + $0x10] sm:$0xff]
        %v240 = vld [vmem:[%s191 + $0x18] sm:$0xff]
        %v241 = vld [vmem:[%s191 + $0x20] sm:$0xff]
        %v242 = vld [vmem:[%s191 + $0x28] sm:$0xff]
        %v243 = vld [vmem:[%s191 + $0x30] sm:$0xff]
        %v244 = vld [vmem:[%s191 + $0x38] sm:$0xff]
        %v245 = vld [vmem:[%s200] sm:$0xff]
        %v246 = vld [vmem:[%s200 + $0x8] sm:$0xff]
        %v247 = vld [vmem:[%s200 + $0x10] sm:$0xff]
        %v248 = vld [vmem:[%s200 + $0x18] sm:$0xff]
        %v249 = vld [vmem:[%s200 + $0x20] sm:$0xff]
        %v250 = vld [vmem:[%s200 + $0x28] sm:$0xff]
        %v251 = vld [vmem:[%s200 + $0x30] sm:$0xff]
        %v252 = vld [vmem:[%s200 + $0x38] sm:$0xff]
        %vm253 = vcmp.ge.f32.partialorder %v245, 0.5
        %vm254 = vcmp.ge.f32.partialorder %v246, 0.5
        %vm255 = vcmp.ge.f32.partialorder %v247, 0.5
        %vm256 = vcmp.ge.f32.partialorder %v248, 0.5
        %vm257 = vcmp.ge.f32.partialorder %v249, 0.5
        %vm258 = vcmp.ge.f32.partialorder %v250, 0.5
        %vm259 = vcmp.ge.f32.partialorder %v251, 0.5
        %vm260 = vcmp.ge.f32.partialorder %v252, 0.5
        %v261 = vsub.f32 1.0, %v237
        %v262 = vsub.f32 1.0, %v238
        %v263 = vsub.f32 1.0, %v239
        %v264 = vsub.f32 1.0, %v240
        %v265 = vsub.f32 1.0, %v241
        %v266 = vsub.f32 1.0, %v242
        %v267 = vsub.f32 1.0, %v243
        %v268 = vsub.f32 1.0, %v244
        %v269 = vsel %vm253, %v237, %v261
        %v270 = vsel %vm254, %v238, %v262
        %v271 = vsel %vm255, %v239, %v263
        %v272 = vsel %vm256, %v240, %v264
        %v273 = vsel %vm257, %v241, %v265
        %v274 = vsel %vm258, %v242, %v266
        %v275 = vsel %vm259, %v243, %v267
        %v276 = vsel %vm260, %v244, %v268
        %v277 = vlog2.pop %v269
        %v278 = vmul.f32 %v277, 0.6931472
        %v279 = vlog2.pop %v270
        %v280 = vmul.f32 %v279, 0.6931472
        %v281 = vlog2.pop %v271
        %v282 = vmul.f32 %v281, 0.6931472
        %v283 = vlog2.pop %v272
        %v284 = vmul.f32 %v283, 0.6931472
        %v285 = vlog2.pop %v273
        %v286 = vmul.f32 %v285, 0.6931472
        %v287 = vlog2.pop %v274
        %v288 = vmul.f32 %v287, 0.6931472
        %v289 = vlog2.pop %v275
        %v290 = vmul.f32 %v289, 0.6931472
        %v291 = vlog2.pop %v276
        %v292 = vmul.f32 %v291, 0.6931472
        %v293 = vmax.f32 %v278, -100.0
        %v294 = vmax.f32 %v280, -100.0
        %v295 = vmax.f32 %v282, -100.0
        %v296 = vmax.f32 %v284, -100.0
        %v297 = vmax.f32 %v286, -100.0
        %v298 = vmax.f32 %v288, -100.0
        %v299 = vmax.f32 %v290, -100.0
        %v300 = vmax.f32 %v292, -100.0
        %v301 = vsub.f32 0.0, %v293
        %v302 = vsub.f32 0.0, %v294
        %v303 = vsub.f32 0.0, %v295
        %v304 = vsub.f32 0.0, %v296
        %v305 = vsub.f32 0.0, %v297
        %v306 = vsub.f32 0.0, %v298
        %v307 = vsub.f32 0.0, %v299
        %v308 = vsub.f32 0.0, %v300
        %v309 = vsub.f32 1.0, %v269
        %v310 = vsub.f32 1.0, %v270
        %v311 = vsub.f32 1.0, %v271
        %v312 = vsub.f32 1.0, %v272
        %v313 = vsub.f32 1.0, %v273
        %v314 = vsub.f32 1.0, %v274
        %v315 = vsub.f32 1.0, %v275
        %v316 = vsub.f32 1.0, %v276
        %v317 = vmul.f32 %v309, %v309
        %v318 = vmul.f32 %v310, %v310
        %v319 = vmul.f32 %v311, %v311
        %v320 = vmul.f32 %v312, %v312
        %v321 = vmul.f32 %v313, %v313
        %v322 = vmul.f32 %v314, %v314
        %v323 = vmul.f32 %v315, %v315
        %v324 = vmul.f32 %v316, %v316
        %v325 = vmul.f32 %v317, %v301
        %v326 = vmul.f32 %v318, %v302
        %v327 = vmul.f32 %v319, %v303
        %v328 = vmul.f32 %v320, %v304
        %v329 = vmul.f32 %v321, %v305
        %v330 = vmul.f32 %v322, %v306
        %v331 = vmul.f32 %v323, %v307
        %v332 = vmul.f32 %v324, %v308
        %v333 = vld [vmem:[%s225] sm:$0xff]
        %v334 = vadd.f32 %v325, %v326
        %v335 = vadd.f32 %v334, %v327
        %v336 = vadd.f32 %v335, %v328
        %v337 = vadd.f32 %v336, %v329
        %v338 = vadd.f32 %v337, %v330
        %v339 = vadd.f32 %v338, %v331
        %v340 = vadd.f32 %v339, %v332
        %v341 = vadd.f32 %v333, %v340
        %342 = vst [vmem:[%s225] sm:$0xff] %v341
        %s343 = sand.u32 %s102, 1
        %s344 = scalar_lea.sflag [#allocation4], %s343
        %s345 = sand.u32 %s102, 1
        %s346 = smul.addr %s345, 8
        %s347 = scalar_lea.vmem [#allocation7], %s346
        // Predicated region
        $region41: #{tpu_custom_call.1} parent=27 // pred_check
          %p348 = pneg %p112
        $region42: #{tpu_custom_call.1} parent=27 // pred_check_branch
          %350 = sbr.rel (%p348) target = $region44
        $region43: #{tpu_custom_call.1} parent=27 // pred_region
          %s352 = ssub.s32 128, 128
          %353 = vsyncadd %s344, %s352
          %s354 = smul.addr %s26, 128
          %s355 = scalar_lea.hbm %s2, %s354
          %s357 = sshll.u32 %s347, 4
          %s358 = int_to_ptr.vmem [resolvable:$true] %s357
          %360 = dma.vmem_to_hbm [thread:$0]  %s358, 128, %s355, %s344
        $region44: #{tpu_custom_call.1} parent=27 // pred_fallthru
          _
      $region28: #{tpu_custom_call.1} parent=5 // pred_fallthru
        _
      %p361 = scmp.le.s32.totalorder 2, %s17
      // Predicated region
      $region45: #{tpu_custom_call.1} parent=5 // pred_check
        %p362 = pneg %p361
      $region46: #{tpu_custom_call.1} parent=5 // pred_check_branch
        %364 = sbr.rel (%p362) target = $region48
      $region47: #{tpu_custom_call.1} parent=5 // pred_region
        %s365 = ssub.s32 %s17, 2
        // Predicated region
        $region49: #{tpu_custom_call.1} parent=47 // pred_check
          %p366 = pneg %p118
        $region50: #{tpu_custom_call.1} parent=47 // pred_check_branch
          %368 = sbr.rel (%p366) target = $region52
        $region51: #{tpu_custom_call.1} parent=47 // pred_region
          %s369 = sand.u32 %s103, 1
          %s370 = scalar_lea.sflag [#allocation4], %s369
          %s371 = sand.u32 %s103, 1
          %s372 = smul.addr %s371, 8
          %s373 = scalar_lea.vmem [#allocation7], %s372
          %374 = dma.done %s370, 128
        $region52: #{tpu_custom_call.1} parent=47 // pred_fallthru
          _
      $region48: #{tpu_custom_call.1} parent=5 // pred_fallthru
        _
    $region6: #{tpu_custom_call.1} parent=1 // loop_footer
      %s21 = sadd.s32 1, %s17
    $region7: #{tpu_custom_call.1} parent=1 // loop_footer_branch
      %16 = sbr.rel target = $region3
    $region8: #{tpu_custom_call.1} parent=1 // loop_exit
      _
    %375 = vsyncpa [#allocation3], 1
    %s376 = scalar_lea.sflag [#allocation3], 1
    %377 = vsyncpa %s376, 1
    %378 = vsyncpa [#allocation6], 1
    %s379 = scalar_lea.sflag [#allocation6], 1
    %380 = vsyncpa %s379, 1
    %381 = vsyncpa [#allocation4], 1
    %s382 = scalar_lea.sflag [#allocation4], 1
    %383 = vsyncpa %s382, 1

</llo_original>
